<compile_context>
chip_gen: v7x
topology: tpu7x:2x2x1
jax: 0.10.0
libtpu: 0.0.40
codegen_flags: <defaults>
</compile_context>

<pallas_src>
import functools
import numpy as np

import jax
import jax.numpy as jnp
from jax import lax
from jax.experimental import pallas as pl
from jax.experimental.pallas import tpu as pltpu


# TODO(synk): torch's default nn.GELU is erf-based; tanh-approximate GELU is
# used here for a guaranteed Mosaic lowering (max abs deviation ~1e-3).
def _gelu(x):
    return jax.nn.gelu(x, approximate=True)


# ------------------------------ tiling helpers ------------------------------

@functools.lru_cache(maxsize=None)
def _row_target():
    """Row (sublane) tile target: 512 on v6e/v7x, 256 on v5* (16 MiB scoped VMEM)."""
    try:
        kind = jax.devices()[0].device_kind.lower()
    except Exception:
        return 256
    return 256 if "v5" in kind else 512


def _row_tile(m):
    """Row tile: full dim when small, else the per-chip target (8-aligned)."""
    t = _row_target()
    return m if m <= t else t


def _div_tile(dim, target, align):
    """Largest multiple of `align` <= target that divides `dim`, else full dim.
    # TODO(synk): dims with no 128-aligned divisor fall back to the full dim;
    # the robust fix is padding + cdiv grid + masked finalize.
    """
    if dim <= target:
        return dim
    t = (target // align) * align
    while t >= align:
        if dim % t == 0:
            return t
        t -= align
    return dim


# ----------------------------- Pallas kernels ------------------------------

def _matmul_kernel(x_ref, w_ref, b_ref, o_ref, acc_ref, *, gelu):
    # Tiled (M, N, K) matmul; activations cast to bf16, weights already bf16,
    # f32 VMEM accumulator over the K (reduction) grid axis.
    k = pl.program_id(2)

    @pl.when(k == 0)
    def _():
        acc_ref[...] = jnp.zeros_like(acc_ref)

    acc_ref[...] += jnp.dot(x_ref[...].astype(jnp.bfloat16), w_ref[...],
                            preferred_element_type=jnp.float32)

    @pl.when(k == pl.num_programs(2) - 1)
    def _():
        y = acc_ref[...] + b_ref[...]
        if gelu:
            y = _gelu(y)
        o_ref[...] = y.astype(o_ref.dtype)


def linear(x, w, b, gelu=False):
    M, K = x.shape
    _, N = w.shape
    tm = _row_tile(M)
    tn = _div_tile(N, 512, 128)
    tk = _div_tile(K, 512, 128)
    grid = (pl.cdiv(M, tm), N // tn, K // tk)
    return pl.pallas_call(
        functools.partial(_matmul_kernel, gelu=gelu),
        out_shape=jax.ShapeDtypeStruct((M, N), jnp.float32),
        grid=grid,
        in_specs=[pl.BlockSpec((tm, tk), lambda i, j, k: (i, k)),
                  pl.BlockSpec((tk, tn), lambda i, j, k: (k, j)),
                  pl.BlockSpec((1, tn), lambda i, j, k: (0, j))],
        out_specs=pl.BlockSpec((tm, tn), lambda i, j, k: (i, j)),
        scratch_shapes=[pltpu.VMEM((tm, tn), jnp.float32)],
        compiler_params=pltpu.CompilerParams(
            dimension_semantics=("parallel", "parallel", "arbitrary")),
    )(x, w, b.reshape(1, N))


def _mlp_kernel(x_ref, g_ref, bn_ref, w1_ref, b1_ref, w2_ref, b2_ref,
                o_ref, xn_ref, acc_ref):
    # Fused: y = x + W2( GELU( LN(x) @ W1 + b1 ) ) + b2, tiled over the hidden
    # dim (reduction axis h); LN is computed once per row tile and cached in a
    # bf16 VMEM scratch.  Weights arrive as bf16.
    h = pl.program_id(1)

    @pl.when(h == 0)
    def _():
        x = x_ref[...].astype(jnp.float32)
        mu = jnp.mean(x, axis=-1, keepdims=True)
        var = jnp.mean((x - mu) ** 2, axis=-1, keepdims=True)   # biased (torch LN)
        xn = (x - mu) * lax.rsqrt(var + 1e-5) * g_ref[...] + bn_ref[...]
        xn_ref[...] = xn.astype(xn_ref.dtype)
        acc_ref[...] = jnp.zeros_like(acc_ref)

    hid = _gelu(jnp.dot(xn_ref[...], w1_ref[...],
                        preferred_element_type=jnp.float32) + b1_ref[...])
    acc_ref[...] += jnp.dot(hid.astype(jnp.bfloat16), w2_ref[...],
                            preferred_element_type=jnp.float32)

    @pl.when(h == pl.num_programs(1) - 1)
    def _():
        o_ref[...] = (x_ref[...].astype(jnp.float32) + acc_ref[...]
                      + b2_ref[...]).astype(o_ref.dtype)


def fused_mlp(x, g, bn, w1, b1, w2, b2):
    M, D = x.shape
    H = w1.shape[1]
    tm = _row_tile(M)
    th = _div_tile(H, 512, 128)
    return pl.pallas_call(
        _mlp_kernel,
        out_shape=jax.ShapeDtypeStruct((M, D), x.dtype),
        grid=(pl.cdiv(M, tm), H // th),
        in_specs=[pl.BlockSpec((tm, D), lambda i, h: (i, 0)),
                  pl.BlockSpec((1, D), lambda i, h: (0, 0)),
                  pl.BlockSpec((1, D), lambda i, h: (0, 0)),
                  pl.BlockSpec((D, th), lambda i, h: (0, h)),
                  pl.BlockSpec((1, th), lambda i, h: (0, h)),
                  pl.BlockSpec((th, D), lambda i, h: (h, 0)),
                  pl.BlockSpec((1, D), lambda i, h: (0, 0))],
        out_specs=pl.BlockSpec((tm, D), lambda i, h: (i, 0)),
        scratch_shapes=[pltpu.VMEM((tm, D), jnp.bfloat16),
                        pltpu.VMEM((tm, D), jnp.float32)],
        compiler_params=pltpu.CompilerParams(
            dimension_semantics=("parallel", "arbitrary")),
    )(x, g.reshape(1, D), bn.reshape(1, D), w1, b1.reshape(1, H), w2,
      b2.reshape(1, D))


def _modulation_kernel(x_ref, g_ref, b_ref, w1_ref, b1_ref, w2_ref, b2_ref,
                       o_ref):
    # One batch: LN(x) per token -> mean over tokens (context) -> tiny adaptive
    # MLP, all fused.  Avoids writing x_norm to HBM and a separate mean pass.
    x = x_ref[0].astype(jnp.float32)                         # (N, D)
    mu = jnp.mean(x, axis=-1, keepdims=True)
    var = jnp.mean((x - mu) ** 2, axis=-1, keepdims=True)
    xn = (x - mu) * lax.rsqrt(var + 1e-5) * g_ref[...] + b_ref[...]
    ctx = jnp.mean(xn, axis=0, keepdims=True)                # (1, D)
    h = _gelu(jnp.dot(ctx.astype(jnp.bfloat16), w1_ref[...],
                      preferred_element_type=jnp.float32) + b1_ref[...])
    out = (jnp.dot(h.astype(jnp.bfloat16), w2_ref[...],
                   preferred_element_type=jnp.float32) + b2_ref[...])
    o_ref[0] = out.astype(o_ref.dtype)


def modulation(x, g, b, w1, b1, w2, b2):
    B, N, D = x.shape
    A = w1.shape[1]
    O = w2.shape[1]
    out = pl.pallas_call(
        _modulation_kernel,
        out_shape=jax.ShapeDtypeStruct((B, 1, O), jnp.float32),
        grid=(B,),
        in_specs=[pl.BlockSpec((1, N, D), lambda i: (i, 0, 0)),
                  pl.BlockSpec((1, D), lambda i: (0, 0)),
                  pl.BlockSpec((1, D), lambda i: (0, 0)),
                  pl.BlockSpec((D, A), lambda i: (0, 0)),
                  pl.BlockSpec((1, A), lambda i: (0, 0)),
                  pl.BlockSpec((A, O), lambda i: (0, 0)),
                  pl.BlockSpec((1, O), lambda i: (0, 0))],
        out_specs=pl.BlockSpec((1, 1, O), lambda i: (i, 0, 0)),
        compiler_params=pltpu.CompilerParams(dimension_semantics=("parallel",)),
    )(x, g.reshape(1, D), b.reshape(1, D), w1, b1.reshape(1, A), w2,
      b2.reshape(1, O))
    return out.reshape(B, O)


def _spectral_kernel(x_ref, g_ref, b_ref, filt_ref, bias_ref, exp_ref,
                     cf_ref, sf_ref, ci_ref, si_ref, o_ref):
    # One batch, fully fused attention path:
    #   LN(x) in-kernel -> rfft along tokens on the full (N, D) slab ->
    #   per-frequency per-head filter/bias (expanded heads->channels via a tiny
    #   (H, D) block matmul) -> complex magnitude-GELU -> irfft ->
    #   write 2*x + filtered (inner + outer residuals fused).
    x = x_ref[0].astype(jnp.float32)                                   # (N, D)
    mu = jnp.mean(x, axis=-1, keepdims=True)
    var = jnp.mean((x - mu) ** 2, axis=-1, keepdims=True)
    xn = ((x - mu) * lax.rsqrt(var + 1e-5) * g_ref[...]
          + b_ref[...]).astype(jnp.bfloat16)                           # (N, D)

    re = jnp.dot(cf_ref[...], xn, preferred_element_type=jnp.float32)  # (K, D)
    im = jnp.dot(sf_ref[...], xn, preferred_element_type=jnp.float32)  # (K, D)

    # heads -> channels expansion inside the kernel (only (Kp, H) crossed HBM)
    filt = jnp.dot(filt_ref[0], exp_ref[...],
                   preferred_element_type=jnp.float32)                 # (K, D)
    bias = jnp.dot(bias_ref[0], exp_ref[...],
                   preferred_element_type=jnp.float32)                 # (K, D)

    re_m = re * filt + bias            # real bias touches the real part only
    im_m = im * filt
    mag = jnp.sqrt(re_m * re_m + im_m * im_m)
    scale = _gelu(mag) * pl.reciprocal(mag + 1e-6, approx=True)
    re_a = (re_m * scale).astype(jnp.bfloat16)
    im_a = (im_m * scale).astype(jnp.bfloat16)

    out = (jnp.dot(ci_ref[...], re_a, preferred_element_type=jnp.float32)
           + jnp.dot(si_ref[...], im_a, preferred_element_type=jnp.float32))
    o_ref[0] = (2.0 * x + out).astype(o_ref.dtype)     # x + (x + filtered)


def spectral_core(x, g, b, filt, bias, expand, cf, sf, ci, si):
    B, N, D = x.shape
    Kp = cf.shape[0]
    H = expand.shape[0]
    return pl.pallas_call(
        _spectral_kernel,
        out_shape=jax.ShapeDtypeStruct((B, N, D), x.dtype),
        grid=(B,),
        in_specs=[pl.BlockSpec((1, N, D), lambda i: (i, 0, 0)),
                  pl.BlockSpec((1, D), lambda i: (0, 0)),
                  pl.BlockSpec((1, D), lambda i: (0, 0)),
                  pl.BlockSpec((1, Kp, H), lambda i: (i, 0, 0)),
                  pl.BlockSpec((1, Kp, H), lambda i: (i, 0, 0)),
                  pl.BlockSpec((H, D), lambda i: (0, 0)),
                  pl.BlockSpec((Kp, N), lambda i: (0, 0)),
                  pl.BlockSpec((Kp, N), lambda i: (0, 0)),
                  pl.BlockSpec((N, Kp), lambda i: (0, 0)),
                  pl.BlockSpec((N, Kp), lambda i: (0, 0))],
        out_specs=pl.BlockSpec((1, N, D), lambda i: (i, 0, 0)),
        compiler_params=pltpu.CompilerParams(dimension_semantics=("parallel",)),
    )(x, g.reshape(1, D), b.reshape(1, D), filt, bias, expand, cf, sf, ci, si)


def _ln_head_kernel(x_ref, g_ref, b_ref, w_ref, hb_ref, o_ref):
    # Final LayerNorm (cls token only; LN is row-wise so norm(x)[:,0]==norm(x[:,0]))
    # fused with the classification head.
    x = x_ref[...].astype(jnp.float32)
    mu = jnp.mean(x, axis=-1, keepdims=True)
    var = jnp.mean((x - mu) ** 2, axis=-1, keepdims=True)
    xn = (x - mu) * lax.rsqrt(var + 1e-5) * g_ref[...] + b_ref[...]
    o_ref[...] = (jnp.dot(xn.astype(jnp.bfloat16), w_ref[...],
                          preferred_element_type=jnp.float32)
                  + hb_ref[...]).astype(o_ref.dtype)


def ln_head(x, g, b, w, hb):
    B, D = x.shape
    C = w.shape[1]
    return pl.pallas_call(
        _ln_head_kernel,
        out_shape=jax.ShapeDtypeStruct((B, C), jnp.float32),
        grid=(1,),
        in_specs=[pl.BlockSpec((B, D), lambda i: (0, 0)),
                  pl.BlockSpec((1, D), lambda i: (0, 0)),
                  pl.BlockSpec((1, D), lambda i: (0, 0)),
                  pl.BlockSpec((D, C), lambda i: (0, 0)),
                  pl.BlockSpec((1, C), lambda i: (0, 0))],
        out_specs=pl.BlockSpec((B, C), lambda i: (0, 0)),
    )(x, g.reshape(1, D), b.reshape(1, D), w, hb.reshape(1, C))


# ----------------------- DFT matrices (rfft / irfft, ortho) -----------------

def make_dft_mats(seq_len):
    N = seq_len
    K = N // 2 + 1
    K_pad = ((K + 7) // 8) * 8          # sublane-align the frequency axis
    k = np.arange(K)
    n = np.arange(N)
    s = 1.0 / np.sqrt(N)
    ang = 2.0 * np.pi * np.outer(k, n) / N                    # (K, N)
    cf = np.zeros((K_pad, N), np.float32)
    sf = np.zeros((K_pad, N), np.float32)
    cf[:K] = np.cos(ang) * s                                  # Re(rfft) = cf @ x
    sf[:K] = -np.sin(ang) * s                                 # Im(rfft) = sf @ x
    w = np.full((K,), 2.0)
    w[0] = 1.0
    if N % 2 == 0:
        w[-1] = 1.0
    ang_i = 2.0 * np.pi * np.outer(n, k) / N                  # (N, K)
    ci = np.zeros((N, K_pad), np.float32)
    si = np.zeros((N, K_pad), np.float32)
    ci[:, :K] = np.cos(ang_i) * w[None, :] * s                # irfft = ci@Re + si@Im
    si[:, :K] = -np.sin(ang_i) * w[None, :] * s
    bf16 = lambda a: jnp.asarray(a, jnp.bfloat16)             # MXU operands in bf16
    return dict(cf=bf16(cf), sf=bf16(sf), ci=bf16(ci), si=bf16(si),
                K=K, K_pad=K_pad)


def make_head_expand(num_heads, embed_dim):
    # (H, D) 0/1 block matrix: filt_D = filt_H @ expand broadcasts each head's
    # scalar to its head_dim channel slice (kept f32 for precision).
    hd = embed_dim // num_heads
    e = np.zeros((num_heads, embed_dim), np.float32)
    for h in range(num_heads):
        e[h, h * hd:(h + 1) * hd] = 1.0
    return jnp.asarray(e)


# ------------------------------- parameters --------------------------------

def _xavier_uniform(key, fan_in, fan_out, dtype=jnp.float32):
    limit = np.sqrt(6.0 / (fan_in + fan_out))
    w = jax.random.uniform(key, (fan_in, fan_out), jnp.float32, -limit, limit)
    return w.astype(dtype)


def init_params(key, *, img_size, patch_size, in_chans, embed_dim, depth,
                num_heads, mlp_ratio, num_classes):
    n_patches = (img_size // patch_size) ** 2
    seq_len = n_patches + 1
    K = seq_len // 2 + 1
    hidden = int(embed_dim * mlp_ratio)
    a_hidden = max(embed_dim // 4, 1)
    patch_dim = in_chans * patch_size * patch_size

    keys = jax.random.split(key, 4 + depth)
    # Large weight matrices live in HBM as bf16 (halves weight DMA + VMEM);
    # biases / LN params / spectral base params stay f32.
    p = {
        "proj_w": _xavier_uniform(keys[0], patch_dim, embed_dim, jnp.bfloat16),
        "proj_b": jnp.zeros((embed_dim,), jnp.float32),
        "cls_token": 0.02 * jax.random.normal(keys[1], (1, 1, embed_dim), jnp.float32),
        "pos_embed": 0.02 * jax.random.normal(keys[2], (1, seq_len, embed_dim), jnp.float32),
        "norm_g": jnp.ones((embed_dim,), jnp.float32),
        "norm_b": jnp.zeros((embed_dim,), jnp.float32),
        "head_w": _xavier_uniform(keys[3], embed_dim, num_classes, jnp.bfloat16),
        "head_b": jnp.zeros((num_classes,), jnp.float32),
        "blocks": [],
    }
    for i in range(depth):
        bk = jax.random.split(keys[4 + i], 4)
        p["blocks"].append(dict(
            pre_norm_g=jnp.ones((embed_dim,), jnp.float32),
            pre_norm_b=jnp.zeros((embed_dim,), jnp.float32),
            base_filter=jnp.ones((num_heads, K, 1), jnp.float32),
            base_bias=jnp.full((num_heads, K, 1), -0.1, jnp.float32),
            amlp_w1=_xavier_uniform(bk[0], embed_dim, a_hidden, jnp.bfloat16),
            amlp_b1=jnp.zeros((a_hidden,), jnp.float32),
            amlp_w2=_xavier_uniform(bk[1], a_hidden, num_heads * K * 2, jnp.bfloat16),
            amlp_b2=jnp.zeros((num_heads * K * 2,), jnp.float32),
            mlp_norm_g=jnp.ones((embed_dim,), jnp.float32),
            mlp_norm_b=jnp.zeros((embed_dim,), jnp.float32),
            mlp_w1=_xavier_uniform(bk[2], embed_dim, hidden, jnp.bfloat16),
            mlp_b1=jnp.zeros((hidden,), jnp.float32),
            mlp_w2=_xavier_uniform(bk[3], hidden, embed_dim, jnp.bfloat16),
            mlp_b2=jnp.zeros((embed_dim,), jnp.float32),
        ))
    return p


# --------------------------------- forward ---------------------------------

def patch_embed(x, w, b, patch_size):
    # Conv2d(kernel=stride=patch) == per-patch linear over (c, ph, pw) features.
    B, C, H, W = x.shape
    ps = patch_size
    Hp, Wp = H // ps, W // ps
    patches = (x.reshape(B, C, Hp, ps, Wp, ps)
               .transpose(0, 2, 4, 1, 3, 5)
               .reshape(B, Hp * Wp, C * ps * ps))
    out = linear(patches.reshape(B * Hp * Wp, C * ps * ps), w, b)
    return out.reshape(B, Hp * Wp, -1)


def spectral_attention(x, bp, num_heads, dft, expand):
    # Returns x + (x + filtered): both the inner (attention-module) residual and
    # the outer (encoder-block) residual are fused into the spectral kernel.
    B, N, D = x.shape
    K, Kp = dft["K"], dft["K_pad"]

    # fused: LN(x) -> token mean (context) -> tiny adaptive MLP
    adapt = modulation(x, bp["pre_norm_g"], bp["pre_norm_b"],
                       bp["amlp_w1"], bp["amlp_b1"],
                       bp["amlp_w2"], bp["amlp_b2"])
    adapt = adapt.reshape(B, num_heads, K, 2)
    eff_filter = bp["base_filter"][None, :, :, 0] * (1.0 + adapt[..., 0])  # (B,H,K)
    eff_bias = bp["base_bias"][None, :, :, 0] + adapt[..., 1]              # (B,H,K)

    def to_freq_major(t):              # (B, H, K) -> (B, Kp, H), zero-padded freqs
        t = jnp.transpose(t, (0, 2, 1))
        return jnp.pad(t, ((0, 0), (0, Kp - K), (0, 0)))

    return spectral_core(x, bp["pre_norm_g"], bp["pre_norm_b"],
                         to_freq_major(eff_filter), to_freq_major(eff_bias),
                         expand, dft["cf"], dft["sf"], dft["ci"], dft["si"])


def block_forward(x, bp, num_heads, dft, expand):
    x = spectral_attention(x, bp, num_heads, dft, expand)   # 2x + filtered
    B, N, D = x.shape
    y = fused_mlp(x.reshape(B * N, D), bp["mlp_norm_g"], bp["mlp_norm_b"],
                  bp["mlp_w1"], bp["mlp_b1"], bp["mlp_w2"], bp["mlp_b2"])
    return y.reshape(B, N, D)          # fused kernel already added the MLP residual


def fftnet_vit_forward(x, params, *, patch_size, num_heads, seq_len, dft, expand):
    B = x.shape[0]
    D = params["proj_w"].shape[1]
    tok = patch_embed(x, params["proj_w"], params["proj_b"], patch_size)
    cls = jnp.broadcast_to(params["cls_token"], (B, 1, D))
    h = jnp.concatenate([cls, tok], axis=1) + params["pos_embed"]   # (B, seq_len, D)
    # pos_drop: identity in eval
    for bp in params["blocks"]:
        h = block_forward(h, bp, num_heads, dft, expand)
    cls_out = h[:, 0]                                               # (B, D)
    return ln_head(cls_out, params["norm_g"], params["norm_b"],
                   params["head_w"], params["head_b"])              # (B, classes)


# ----------------------------------- main -----------------------------------

if __name__ == "__main__":
    img_size, patch_size, in_chans = 16, 4, 3
    embed_dim, depth, num_heads = 32, 2, 4
    mlp_ratio, num_classes = 4.0, 10
    n_patches = (img_size // patch_size) ** 2
    seq_len = n_patches + 1                                         # 17

    key = jax.random.PRNGKey(0)
    kx, kp = jax.random.split(key)
    x = jax.random.normal(kx, (2, in_chans, img_size, img_size), jnp.float32)

    params = init_params(kp, img_size=img_size, patch_size=patch_size,
                         in_chans=in_chans, embed_dim=embed_dim, depth=depth,
                         num_heads=num_heads, mlp_ratio=mlp_ratio,
                         num_classes=num_classes)
    dft = make_dft_mats(seq_len)
    expand = make_head_expand(num_heads, embed_dim)

    out = fftnet_vit_forward(x, params, patch_size=patch_size,
                             num_heads=num_heads, seq_len=seq_len, dft=dft,
                             expand=expand)
    jax.block_until_ready(out)
    assert out.shape == (2, num_classes) and out.dtype == jnp.float32
    print("KERNEL_OK")
</pallas_src>

<mosaic_0001>
module attributes {stable_mosaic.version = 11 : i64} {
  func.func @_matmul_kernel(%arg0: i32, %arg1: i32, %arg2: i32, %arg3: memref<32x48xf32, #tpu.memory_space<vmem>>, %arg4: memref<48x32xbf16, #tpu.memory_space<vmem>>, %arg5: memref<1x32xf32, #tpu.memory_space<vmem>>, %arg6: memref<32x32xf32, #tpu.memory_space<vmem>>, %arg7: memref<32x32xf32, #tpu.memory_space<vmem>>) attributes {dimension_semantics = [#tpu.dimension_semantics<parallel>, #tpu.dimension_semantics<parallel>, #tpu.dimension_semantics<arbitrary>], iteration_bounds = array<i64: 1, 1, 1>, scalar_prefetch = 0 : i64, scratch_operands = 1 : i64, tpu.core_type = #tpu.core_type<tc>, window_params = [{transform_indices = @transform_0, window_bounds = array<i64: 32, 48>}, {transform_indices = @transform_1, window_bounds = array<i64: 48, 32>}, {transform_indices = @transform_2, window_bounds = array<i64: 1, 32>}, {transform_indices = @transform_3, window_bounds = array<i64: 32, 32>}]} {
    %c0_i32 = arith.constant 0 : i32
    %0 = arith.cmpi eq, %arg2, %c0_i32 : i32
    %1 = arith.extui %0 : i1 to i32
    %c0_i32_0 = arith.constant 0 : i32
    %2 = arith.cmpi ne, %1, %c0_i32_0 : i32
    scf.if %2 {
      %cst_10 = arith.constant 0.000000e+00 : f32
      %13 = vector.broadcast %cst_10 : f32 to vector<32x32xf32>
      %c0_11 = arith.constant 0 : index
      %c0_12 = arith.constant 0 : index
      %14 = vector.load %arg7[%c0_11, %c0_12] : memref<32x32xf32, #tpu.memory_space<vmem>>, vector<32x32xf32>
      tpu.vector_store %arg7[%c0_11, %c0_12], %13 {strides = array<i32>} : memref<32x32xf32, #tpu.memory_space<vmem>>, vector<32x32xf32>,
    } else {
    }
    %c0 = arith.constant 0 : index
    %c0_1 = arith.constant 0 : index
    %3 = vector.load %arg7[%c0, %c0_1] : memref<32x32xf32, #tpu.memory_space<vmem>>, vector<32x32xf32>
    %c0_2 = arith.constant 0 : index
    %c0_3 = arith.constant 0 : index
    %4 = vector.load %arg3[%c0_2, %c0_3] : memref<32x48xf32, #tpu.memory_space<vmem>>, vector<32x48xf32>
    %5 = arith.truncf %4 : vector<32x48xf32> to vector<32x48xbf16>
    %c0_4 = arith.constant 0 : index
    %c0_5 = arith.constant 0 : index
    %6 = vector.load %arg4[%c0_4, %c0_5] : memref<48x32xbf16, #tpu.memory_space<vmem>>, vector<48x32xbf16>
    %cst = arith.constant dense<0.000000e+00> : vector<32x32xf32>
    %7 = tpu.matmul %5, %6, %cst {dimension_numbers = #tpu.dot_dimension_numbers<[1], [0], [0], [1], [0, 0, 1, 1], [], []>} : vector<32x48xbf16>, vector<48x32xbf16>, vector<32x32xf32> -> vector<32x32xf32>
    %8 = arith.addf %3, %7 : vector<32x32xf32>
    %c0_6 = arith.constant 0 : index
    %c0_7 = arith.constant 0 : index
    %9 = vector.load %arg7[%c0_6, %c0_7] : memref<32x32xf32, #tpu.memory_space<vmem>>, vector<32x32xf32>
    tpu.vector_store %arg7[%c0_6, %c0_7], %8 {strides = array<i32>} : memref<32x32xf32, #tpu.memory_space<vmem>>, vector<32x32xf32>,
    %c0_i32_8 = arith.constant 0 : i32
    %10 = arith.cmpi eq, %arg2, %c0_i32_8 : i32
    %11 = arith.extui %10 : i1 to i32
    %c0_i32_9 = arith.constant 0 : i32
    %12 = arith.cmpi ne, %11, %c0_i32_9 : i32
    scf.if %12 {
      %c0_10 = arith.constant 0 : index
      %c0_11 = arith.constant 0 : index
      %13 = vector.load %arg7[%c0_10, %c0_11] : memref<32x32xf32, #tpu.memory_space<vmem>>, vector<32x32xf32>
      %c0_12 = arith.constant 0 : index
      %c0_13 = arith.constant 0 : index
      %14 = vector.load %arg5[%c0_12, %c0_13] : memref<1x32xf32, #tpu.memory_space<vmem>>, vector<1x32xf32>
      %15 = vector.broadcast %14 : vector<1x32xf32> to vector<32x32xf32>
      %16 = arith.addf %13, %15 : vector<32x32xf32>
      %c0_14 = arith.constant 0 : index
      %c0_15 = arith.constant 0 : index
      %17 = vector.load %arg6[%c0_14, %c0_15] : memref<32x32xf32, #tpu.memory_space<vmem>>, vector<32x32xf32>
      tpu.vector_store %arg6[%c0_14, %c0_15], %16 {strides = array<i32>} : memref<32x32xf32, #tpu.memory_space<vmem>>, vector<32x32xf32>,
    } else {
    }
    return
  }
  func.func @transform_0(%arg0: i32, %arg1: i32, %arg2: i32) -> (i32, i32) {
    %c0_i32 = arith.constant 0 : i32
    return %arg0, %arg2 : i32, i32
  }
  func.func @transform_1(%arg0: i32, %arg1: i32, %arg2: i32) -> (i32, i32) {
    %c0_i32 = arith.constant 0 : i32
    return %arg2, %arg1 : i32, i32
  }
  func.func @transform_2(%arg0: i32, %arg1: i32, %arg2: i32) -> (i32, i32) {
    %c0_i32 = arith.constant 0 : i32
    %c0_i32_0 = arith.constant 0 : i32
    return %c0_i32, %arg1 : i32, i32
  }
  func.func @transform_3(%arg0: i32, %arg1: i32, %arg2: i32) -> (i32, i32) {
    %c0_i32 = arith.constant 0 : i32
    return %arg0, %arg1 : i32, i32
  }
}

</mosaic_0001>

<llo_original>
// kernel: tpu_custom_call.1
$region0: #{tpu_custom_call.1}
  #allocation0 [shape = 'u32[]', space=smem, size = 0x4, offset = 0x4, fixed_abs, tag = 'smem constant byte address 0x4 - core index']
  #allocation1 [shape = 'u32[144,128]{1,0:T(1,128)}', space=vmem, size = 0x12000, scoped, tag = 'internal scratch']
  #allocation2 [shape = 'f32[32,32]{1,0:T(8,128)}', space=vmem, size = 0x4000, scoped, tag = 'scratch operand']
  %s0 = inlined_call_operand.vmem [shape: f32[32,48], index: 0, kind: input, shape index: {}]
  %s1 = inlined_call_operand.vmem [shape: bf16[48,32], index: 1, kind: input, shape index: {}]
  %s2 = inlined_call_operand.vmem [shape: f32[1,32], index: 2, kind: input, shape index: {}]
  %s3 = inlined_call_operand.hbm [shape: f32[32,32], index: 3, kind: output, shape index: {}]
  %s4 = sld [smem:[#allocation0]]
  $region30: #{tpu_custom_call.1} parent=0
    _
  %s6 = ssub.s32 1, %s4
  %s7 = scalar_select 0, %s6, %s4
  $region1: #{tpu_custom_call.1} parent=0
    #allocation3 [shape = 'u8[16384]{0}', space=vmem, size = 0x4000, scoped, tag = 'output window, operand 0, single buffered']
    #allocation4 [shape = 's32[1]{0}', space=sflag, size = 0x4, scoped, tag = 'scoped memory for tpu_custom_call.1']
    %8 = vsyncpa [#allocation4], 0
    // Predicated region
    $region2: #{tpu_custom_call.1} parent=1 // pred_check
      _
    $region3: #{tpu_custom_call.1} parent=1 // pred_check_branch
      %10 = sbr.rel (0) target = $region5
    $region4: #{tpu_custom_call.1} parent=1 // pred_region
      _
    $region5: #{tpu_custom_call.1} parent=1 // pred_fallthru
      _
    // Predicated region
    $region6: #{tpu_custom_call.1} parent=1 // pred_check
      _
    $region7: #{tpu_custom_call.1} parent=1 // pred_check_branch
      %12 = sbr.rel (0) target = $region9
    $region8: #{tpu_custom_call.1} parent=1 // pred_region
      _
    $region9: #{tpu_custom_call.1} parent=1 // pred_fallthru
      _
    // Predicated region
    $region10: #{tpu_custom_call.1} parent=1 // pred_check
      _
    $region11: #{tpu_custom_call.1} parent=1 // pred_check_branch
      %14 = sbr.rel (0) target = $region13
    $region12: #{tpu_custom_call.1} parent=1 // pred_region
      _
    $region13: #{tpu_custom_call.1} parent=1 // pred_fallthru
      _
    %p16 = scmp.eq.s32.totalorder 0, 0
    // Predicated region
    $region14: #{tpu_custom_call.1} parent=1 // pred_check
      %p17 = pneg %p16
    $region15: #{tpu_custom_call.1} parent=1 // pred_check_branch
      %19 = sbr.rel (%p17) target = $region17
    $region16: #{tpu_custom_call.1} parent=1 // pred_region
      %vm20 = vcmask 261120
      %21 = vst.msk [vmem:[#allocation2] sm:$0xff] %vm20, 0.0
      %22 = vst.msk [vmem:[#allocation2 + $0x8] sm:$0xff] %vm20, 0.0
      %23 = vst.msk [vmem:[#allocation2 + $0x10] sm:$0xff] %vm20, 0.0
      %24 = vst.msk [vmem:[#allocation2 + $0x18] sm:$0xff] %vm20, 0.0
    $region17: #{tpu_custom_call.1} parent=1 // pred_fallthru
      _
    %v25 = vld [vmem:[#allocation2] sm:$0xff]
    %v26 = vld [vmem:[#allocation2 + $0x8] sm:$0xff]
    %v27 = vld [vmem:[#allocation2 + $0x10] sm:$0xff]
    %v28 = vld [vmem:[#allocation2 + $0x18] sm:$0xff]
    %v29 = vld [vmem:[%s0] sm:$0xff]
    %v30 = vld [vmem:[%s0 + $0x8] sm:$0xff]
    %v31 = vld [vmem:[%s0 + $0x10] sm:$0xff]
    %v32 = vld [vmem:[%s0 + $0x18] sm:$0xff]
    %v33 = vpack.c.bf16 %v30, %v29
    %v34 = vpack.c.bf16 %v32, %v31
    %v35 = vld [vmem:[%s1] sm:$0xf]
    %v36 = vld [vmem:[%s1 + $0x4] sm:$0xf]
    %v37 = vld [vmem:[%s1 + $0x8] sm:$0xf]
    %v38 = vld [vmem:[%s1 + $0xc] sm:$0xf]
    %v39 = vld [vmem:[%s1 + $0x10] sm:$0xf]
    %v40 = vld [vmem:[%s1 + $0x14] sm:$0xf]
    %v47 = vunpack.c.l.b16 %v35
    %v48 = vunpack.c.l.b16 %v36
    %v49 = vunpack.c.l.b16 %v37
    %v50 = vunpack.c.l.b16 %v38
    %v51 = vunpack.c.l.b16 %v39
    %v52 = vunpack.c.l.b16 %v40
    %v53 = vpack.c.b16 %v48, %v47
    %v54 = vpack.c.b16 %v50, %v49
    %v55 = vpack.c.b16 %v52, %v51
    %vm59 = vcmask 392192
    %v61 = vsel %vm59, %v33, 0
    %v64 = vsel %vm59, %v34, 0
    %66 = vmatprep.subr.bf16.mxu0 0
    %67 = vmatpush1.bf16.msra.mxu0 %v53
    %68 = vmatprep.subr.bf16.mxu0 0
    %69 = vmatpush1.bf16.msra.mxu0 %v54
    %70 = vmatprep.subr.bf16.mxu0 0
    %71 = vmatpush1.bf16.msra.mxu0 %v55
    %72 = vmatprep.subr.bf16.mxu0 0
    %73 = vmatpush1.bf16.msra.mxu0 0
    %74 = vmatprep.subr.bf16.mxu0 0
    %75 = vmatpush1.bf16.msra.mxu0 0
    %76 = vmatprep.subr.bf16.mxu0 0
    %77 = vmatpush1.bf16.msra.mxu0 0
    %78 = vmatprep.subr.bf16.mxu0 0
    %79 = vmatpush1.bf16.msra.mxu0 0
    %80 = vmatprep.subr.bf16.mxu0 0
    %81 = vmatpush1.bf16.msra.mxu0 0
    %82 = vmatprep.subr.bf16.mxu0 0
    %83 = vmatpush1.bf16.msra.mxu0 0
    %84 = vmatprep.subr.bf16.mxu0 0
    %85 = vmatpush1.bf16.msra.mxu0 0
    %86 = vmatprep.subr.bf16.mxu0 0
    %87 = vmatpush1.bf16.msra.mxu0 0
    %88 = vmatprep.subr.bf16.mxu0 0
    %89 = vmatpush1.bf16.msra.mxu0 0
    %90 = vmatprep.subr.bf16.mxu0 0
    %91 = vmatpush1.bf16.msra.mxu0 0
    %92 = vmatprep.subr.bf16.mxu0 0
    %93 = vmatpush1.bf16.msra.mxu0 0
    %94 = vmatprep.subr.bf16.mxu0 0
    %95 = vmatpush1.bf16.msra.mxu0 0
    %96 = vmatprep.subr.bf16.mxu0 0
    %97 = vmatpush1.bf16.msra.mxu0 0
    %98 = vmatprep.mubr.bf16.mxu0 0
    %99 = vmatmul.mubr.bf16.gmra.mrb[0].mxu0 %v61
    %v100 = vpop.f32.mrb[0].mxu0
    %v101 = vadd.f32 0.0, %v100
    %v102 = vpop.f32.mrb[0].mxu0
    %v103 = vpop.f32.mrb[0].mxu0
    %v104 = vadd.f32 0.0, %v103
    %v105 = vpop.f32.mrb[0].mxu0
    %106 = vmatprep.mubr.bf16.mxu0 0
    %107 = vmatmul.mubr.bf16.gmra.mrb[0].mxu0 %v64
    %v108 = vpop.f32.mrb[0].mxu0
    %v109 = vadd.f32 0.0, %v108
    %v110 = vpop.f32.mrb[0].mxu0
    %v111 = vpop.f32.mrb[0].mxu0
    %v112 = vadd.f32 0.0, %v111
    %v113 = vpop.f32.mrb[0].mxu0
    %114 = vdwg.mxu0
    %v115 = vadd.f32 %v25, %v101
    %v116 = vadd.f32 %v26, %v104
    %v117 = vadd.f32 %v27, %v109
    %v118 = vadd.f32 %v28, %v112
    %vm119 = vcmask 261120
    %120 = vst.msk [vmem:[#allocation2] sm:$0xff] %vm119, %v115
    %121 = vst.msk [vmem:[#allocation2 + $0x8] sm:$0xff] %vm119, %v116
    %122 = vst.msk [vmem:[#allocation2 + $0x10] sm:$0xff] %vm119, %v117
    %123 = vst.msk [vmem:[#allocation2 + $0x18] sm:$0xff] %vm119, %v118
    // Predicated region
    $region18: #{tpu_custom_call.1} parent=1 // pred_check
      %p124 = pneg %p16
    $region19: #{tpu_custom_call.1} parent=1 // pred_check_branch
      %126 = sbr.rel (%p124) target = $region21
    $region20: #{tpu_custom_call.1} parent=1 // pred_region
      %v127 = vld [vmem:[#allocation2] sm:$0xff]
      %v128 = vld [vmem:[#allocation2 + $0x8] sm:$0xff]
      %v129 = vld [vmem:[#allocation2 + $0x10] sm:$0xff]
      %v130 = vld [vmem:[#allocation2 + $0x18] sm:$0xff]
      %v131 = vld [vmem:[%s2] sm:$0x1]
      %v133 = vlaneseq
      %v134 = vshrl.u32 %v133, 7
      %v135 = vsub.s32 0, %v134
      %v136 = vrot.slane %v131, %v135
      %v138 = vadd.f32 %v127, %v136
      %v139 = vadd.f32 %v128, %v136
      %v140 = vadd.f32 %v129, %v136
      %v141 = vadd.f32 %v130, %v136
      %142 = vst.msk [vmem:[#allocation3] sm:$0xff] %vm119, %v138
      %143 = vst.msk [vmem:[#allocation3 + $0x8] sm:$0xff] %vm119, %v139
      %144 = vst.msk [vmem:[#allocation3 + $0x10] sm:$0xff] %vm119, %v140
      %145 = vst.msk [vmem:[#allocation3 + $0x18] sm:$0xff] %vm119, %v141
    $region21: #{tpu_custom_call.1} parent=1 // pred_fallthru
      _
    // Predicated region
    $region22: #{tpu_custom_call.1} parent=1 // pred_check
      _
    $region23: #{tpu_custom_call.1} parent=1 // pred_check_branch
      %147 = sbr.rel (0) target = $region25
    $region24: #{tpu_custom_call.1} parent=1 // pred_region
      %s149 = ssub.s32 512, 512
      %150 = vsyncadd [#allocation4], %s149
      %s151 = sshll.u32 [#allocation3], 4
      %s152 = int_to_ptr.vmem [resolvable:$true] %s151
      %157 = dma.vmem_to_hbm [thread:$0]  %s152, 512, %s3, [#allocation4], 128, 128, 8
    $region25: #{tpu_custom_call.1} parent=1 // pred_fallthru
      _
    // Predicated region
    $region26: #{tpu_custom_call.1} parent=1 // pred_check
      _
    $region27: #{tpu_custom_call.1} parent=1 // pred_check_branch
      %159 = sbr.rel (0) target = $region29
    $region28: #{tpu_custom_call.1} parent=1 // pred_region
      %160 = dma.done [#allocation4], 512
    $region29: #{tpu_custom_call.1} parent=1 // pred_fallthru
      _
    %161 = vsyncpa [#allocation4], 1

</llo_original>
